<compile_context>
chip_gen: v7x
topology: tpu7x:2x2x1
jax: 0.10.0
libtpu: 0.0.40
codegen_flags: <defaults>
</compile_context>

<pallas_src>
import jax
import jax.numpy as jnp
from jax.experimental import pallas as pl
from jax.experimental.pallas import tpu as pltpu

EPS = 1e-5


# ----------------------------------------------------------------------------
# Kernel
# ----------------------------------------------------------------------------
def fcn_kernel(
    x_ref,        # (TN, C, TS)   spatial chunk of the input
    w1_ref,       # (C, 512)      BN1 + 1/HW folded into Linear(in_f, 512) weight
    b1_ref,       # (1, 512)      folded bias
    w2_ref,       # (1, 512)      BN2 folded into Linear(512, 1) weight (as a row)
    b2_ref,       # (1, 1)        folded bias
    o_ref,        # (TN, 1)       output logits
    acc_ref,      # (TN, C)       VMEM scratch: GAP partial sums
):
    s = pl.program_id(1)

    @pl.when(s == 0)
    def _init():
        acc_ref[...] = jnp.zeros_like(acc_ref)

    # --- base: GAP numerator (1/HW is folded into w1) ---------------------
    x = x_ref[...].astype(jnp.float32)          # (TN, C, TS)
    acc_ref[...] += jnp.sum(x, axis=2)          # lane reduce -> (TN, C)

    @pl.when(s == pl.num_programs(1) - 1)
    def _finalize():
        # Head: Flatten -> BN1 -> Dropout(id) -> Linear -> ReLU
        #       -> BN2 -> Dropout(id) -> Linear(512, 1)
        # BN1/BN2 are pre-folded into w1/b1 and w2/b2 (exact, inference mode).
        h = jnp.dot(acc_ref[...], w1_ref[...],
                    preferred_element_type=jnp.float32) + b1_ref[...]
        h = jnp.maximum(h, 0.0)
        # Final projection as VPU mul + lane reduce (avoids (512,1) MXU tile).
        out = jnp.sum(h * w2_ref[...], axis=-1, keepdims=True) + b2_ref[...]
        o_ref[...] = out.astype(o_ref.dtype)


# ----------------------------------------------------------------------------
# Wrapper helpers
# ----------------------------------------------------------------------------
def _vmem_limit_bytes():
    """Generation-aware scoped-VMEM budget (v7x only has 64 MiB/core)."""
    try:
        cap = pltpu.get_tpu_info().vmem_capacity_bytes
    except Exception:
        cap = 64 * 1024 * 1024  # conservative fallback (v7x-sized)
    return min(int(cap * 3 // 4), 96 * 1024 * 1024)


def _pick_tiles(n, c, hw, bytes_per_elem, budget_bytes):
    """Pick (TN, TS) that divide (N, HW) exactly and fit the VMEM budget."""
    ts = hw
    for cand in (4096, 2048, 1024, 512, 256, 128):
        if hw % cand == 0:
            ts = cand
            break
    tn = n
    for cand in (512, 256, 128, 64, 32, 16, 8):
        if n % cand == 0:
            tn = cand
            break
    # Shrink the batch tile until the double-buffered x tile fits the budget.
    while tn > 8 and tn % 2 == 0 and 2 * tn * c * ts * bytes_per_elem > budget_bytes:
        tn //= 2
    return tn, ts


def _fold_params(p, hw):
    """Fold BN1 (+ 1/HW) into w1/b1 and BN2 into w2/b2.  Exact for inference."""
    s1 = p["bn1_g"] * jax.lax.rsqrt(p["bn1_v"] + EPS)                 # (1, C)
    w1f = (s1.reshape(-1, 1) / hw) * p["w1"]                          # (C, 512)
    b1f = (p["bn1_b"] - p["bn1_m"] * s1) @ p["w1"] + p["b1"]          # (1, 512)

    s2 = p["bn2_g"] * jax.lax.rsqrt(p["bn2_v"] + EPS)                 # (1, 512)
    w2row = s2 * p["w2"].reshape(1, -1)                               # (1, 512)
    b2f = (p["bn2_b"] - p["bn2_m"] * s2) @ p["w2"] + p["b2"]          # (1, 1)
    return (w1f.astype(jnp.float32), b1f.astype(jnp.float32),
            w2row.astype(jnp.float32), b2f.astype(jnp.float32))


# ----------------------------------------------------------------------------
# Forward
# ----------------------------------------------------------------------------
def fcn_forward(x_nchw, params):
    N, C, H, W = x_nchw.shape
    HW = H * W
    x3 = x_nchw.reshape(N, C, HW).astype(jnp.float32)   # glue reshape only

    w1f, b1f, w2row, b2f = _fold_params(params, HW)

    vmem_limit = _vmem_limit_bytes()
    TN, TS = _pick_tiles(N, C, HW, bytes_per_elem=4, budget_bytes=vmem_limit // 2)
    grid = (N // TN, HW // TS)

    const = lambda i, s: (0, 0)   # params stay VMEM-resident across the grid

    return pl.pallas_call(
        fcn_kernel,
        out_shape=jax.ShapeDtypeStruct((N, 1), jnp.float32),
        grid_spec=pltpu.PrefetchScalarGridSpec(
            num_scalar_prefetch=0,
            grid=grid,
            in_specs=[
                pl.BlockSpec((TN, C, TS), lambda i, s: (i, 0, s)),
                pl.BlockSpec(w1f.shape, const),
                pl.BlockSpec(b1f.shape, const),
                pl.BlockSpec(w2row.shape, const),
                pl.BlockSpec(b2f.shape, const),
            ],
            out_specs=pl.BlockSpec((TN, 1), lambda i, s: (i, 0)),
            scratch_shapes=[pltpu.VMEM((TN, C), jnp.float32)],
        ),
        compiler_params=pltpu.CompilerParams(
            dimension_semantics=("parallel", "arbitrary"),
            vmem_limit_bytes=vmem_limit,
        ),
    )(x3, w1f, b1f, w2row, b2f)


# ----------------------------------------------------------------------------
# Params + pure-JAX reference
# ----------------------------------------------------------------------------
def init_params(key, in_f, hidden=512, out_f=1):
    ks = jax.random.split(key, 10)
    u = lambda k, shape, bound: jax.random.uniform(
        k, shape, jnp.float32, minval=-bound, maxval=bound)

    b1l = 1.0 / jnp.sqrt(in_f)
    b2l = 1.0 / jnp.sqrt(hidden)
    return {
        # BatchNorm1d(in_f) — deterministic but non-trivial running stats.
        "bn1_g": 1.0 + 0.1 * u(ks[0], (1, in_f), 1.0),
        "bn1_b": 0.1 * u(ks[1], (1, in_f), 1.0),
        "bn1_m": 0.1 * u(ks[2], (1, in_f), 1.0),
        "bn1_v": 1.0 + 0.1 * jnp.abs(u(ks[3], (1, in_f), 1.0)),
        # Linear(in_f, 512)
        "w1": u(ks[4], (in_f, hidden), b1l),
        "b1": u(ks[5], (1, hidden), b1l),
        # BatchNorm1d(512)
        "bn2_g": 1.0 + 0.1 * u(ks[6], (1, hidden), 1.0),
        "bn2_b": 0.1 * u(ks[7], (1, hidden), 1.0),
        "bn2_m": 0.1 * u(ks[8], (1, hidden), 1.0),
        "bn2_v": 1.0 + 0.1 * jnp.abs(u(ks[9], (1, hidden), 1.0)),
        # Linear(512, 1)
        "w2": u(jax.random.fold_in(key, 100), (hidden, out_f), b2l),
        "b2": u(jax.random.fold_in(key, 101), (1, out_f), b2l),
    }


def fcn_reference(x_nchw, p):
    """Pure-JAX reference (unfolded) for correctness checking."""
    N, C, H, W = x_nchw.shape
    feat = jnp.mean(x_nchw.reshape(N, C, H * W), axis=2)
    h = (feat - p["bn1_m"]) * jax.lax.rsqrt(p["bn1_v"] + EPS) * p["bn1_g"] + p["bn1_b"]
    h = h @ p["w1"] + p["b1"]
    h = jnp.maximum(h, 0.0)
    h = (h - p["bn2_m"]) * jax.lax.rsqrt(p["bn2_v"] + EPS) * p["bn2_g"] + p["bn2_b"]
    return h @ p["w2"] + p["b2"]


# ----------------------------------------------------------------------------
# Main
# ----------------------------------------------------------------------------
if __name__ == "__main__":
    key = jax.random.PRNGKey(0)
    kx, kp = jax.random.split(key)

    # Case 1: square spatial map (single spatial grid step).
    N, C, H, W = 2, 4, 16, 16
    x = jax.random.normal(kx, (N, C, H, W), jnp.float32)
    params = init_params(kp, in_f=C)

    out = jax.block_until_ready(fcn_forward(x, params))
    ref = fcn_reference(x, params)
    assert out.shape == (N, 1), out.shape
    assert jnp.allclose(out, ref, atol=1e-4, rtol=1e-4), (out, ref)

    # Case 2: non-square spatial map -> exercises the multi-step spatial
    # accumulation path (grid spatial extent > 1).
    H2, W2 = 16, 24
    x2 = jax.random.normal(jax.random.fold_in(kx, 1), (N, C, H2, W2), jnp.float32)
    out2 = jax.block_until_ready(fcn_forward(x2, params))
    ref2 = fcn_reference(x2, params)
    assert out2.shape == (N, 1), out2.shape
    assert jnp.allclose(out2, ref2, atol=1e-4, rtol=1e-4), (out2, ref2)

    print("KERNEL_OK")
</pallas_src>

<mosaic_0001>
module attributes {stable_mosaic.version = 11 : i64} {
  func.func @fcn_kernel(%arg0: i32, %arg1: i32, %arg2: memref<2x4x256xf32, #tpu.memory_space<vmem>>, %arg3: memref<4x512xf32, #tpu.memory_space<vmem>>, %arg4: memref<1x512xf32, #tpu.memory_space<vmem>>, %arg5: memref<1x512xf32, #tpu.memory_space<vmem>>, %arg6: memref<1x1xf32, #tpu.memory_space<vmem>>, %arg7: memref<2x1xf32, #tpu.memory_space<vmem>>, %arg8: memref<2x4xf32, #tpu.memory_space<vmem>>) attributes {dimension_semantics = [#tpu.dimension_semantics<parallel>, #tpu.dimension_semantics<arbitrary>], iteration_bounds = array<i64: 1, 1>, scalar_prefetch = 0 : i64, scratch_operands = 1 : i64, tpu.core_type = #tpu.core_type<tc>, window_params = [{transform_indices = @transform_0, window_bounds = array<i64: 2, 4, 256>}, {pipeline_mode = #tpu.pipeline_mode<synchronous>, transform_indices = @transform_1, window_bounds = array<i64: 4, 512>}, {pipeline_mode = #tpu.pipeline_mode<synchronous>, transform_indices = @transform_2, window_bounds = array<i64: 1, 512>}, {pipeline_mode = #tpu.pipeline_mode<synchronous>, transform_indices = @transform_3, window_bounds = array<i64: 1, 512>}, {pipeline_mode = #tpu.pipeline_mode<synchronous>, transform_indices = @transform_4, window_bounds = array<i64: 1, 1>}, {transform_indices = @transform_5, window_bounds = array<i64: 2, 1>}]} {
    %c0_i32 = arith.constant 0 : i32
    %0 = arith.cmpi eq, %arg1, %c0_i32 : i32
    %1 = arith.extui %0 : i1 to i32
    %c0_i32_0 = arith.constant 0 : i32
    %2 = arith.cmpi ne, %1, %c0_i32_0 : i32
    scf.if %2 {
      %cst_9 = arith.constant 0.000000e+00 : f32
      %11 = vector.broadcast %cst_9 : f32 to vector<2x4xf32>
      %c0_10 = arith.constant 0 : index
      %c0_11 = arith.constant 0 : index
      %12 = vector.load %arg8[%c0_10, %c0_11] : memref<2x4xf32, #tpu.memory_space<vmem>>, vector<2x4xf32>
      tpu.vector_store %arg8[%c0_10, %c0_11], %11 {strides = array<i32>} : memref<2x4xf32, #tpu.memory_space<vmem>>, vector<2x4xf32>,
    } else {
    }
    %c0 = arith.constant 0 : index
    %c0_1 = arith.constant 0 : index
    %c0_2 = arith.constant 0 : index
    %3 = vector.load %arg2[%c0, %c0_1, %c0_2] : memref<2x4x256xf32, #tpu.memory_space<vmem>>, vector<2x4x256xf32>
    %c0_3 = arith.constant 0 : index
    %c0_4 = arith.constant 0 : index
    %4 = vector.load %arg8[%c0_3, %c0_4] : memref<2x4xf32, #tpu.memory_space<vmem>>, vector<2x4xf32>
    %cst = arith.constant dense<0.000000e+00> : vector<2x4xf32>
    %5 = vector.multi_reduction <add>, %3, %cst [2] : vector<2x4x256xf32> to vector<2x4xf32>
    %6 = arith.addf %4, %5 : vector<2x4xf32>
    %c0_5 = arith.constant 0 : index
    %c0_6 = arith.constant 0 : index
    %7 = vector.load %arg8[%c0_5, %c0_6] : memref<2x4xf32, #tpu.memory_space<vmem>>, vector<2x4xf32>
    tpu.vector_store %arg8[%c0_5, %c0_6], %6 {strides = array<i32>} : memref<2x4xf32, #tpu.memory_space<vmem>>, vector<2x4xf32>,
    %c0_i32_7 = arith.constant 0 : i32
    %8 = arith.cmpi eq, %arg1, %c0_i32_7 : i32
    %9 = arith.extui %8 : i1 to i32
    %c0_i32_8 = arith.constant 0 : i32
    %10 = arith.cmpi ne, %9, %c0_i32_8 : i32
    scf.if %10 {
      %c0_9 = arith.constant 0 : index
      %c0_10 = arith.constant 0 : index
      %11 = vector.load %arg8[%c0_9, %c0_10] : memref<2x4xf32, #tpu.memory_space<vmem>>, vector<2x4xf32>
      %c0_11 = arith.constant 0 : index
      %c0_12 = arith.constant 0 : index
      %12 = vector.load %arg3[%c0_11, %c0_12] : memref<4x512xf32, #tpu.memory_space<vmem>>, vector<4x512xf32>
      %cst_13 = arith.constant dense<0.000000e+00> : vector<2x512xf32>
      %13 = tpu.matmul %11, %12, %cst_13 {dimension_numbers = #tpu.dot_dimension_numbers<[1], [0], [0], [1], [0, 0, 1, 1], [], []>} : vector<2x4xf32>, vector<4x512xf32>, vector<2x512xf32> -> vector<2x512xf32>
      %c0_14 = arith.constant 0 : index
      %c0_15 = arith.constant 0 : index
      %14 = vector.load %arg4[%c0_14, %c0_15] : memref<1x512xf32, #tpu.memory_space<vmem>>, vector<1x512xf32>
      %15 = vector.broadcast %14 : vector<1x512xf32> to vector<2x512xf32>
      %16 = arith.addf %13, %15 : vector<2x512xf32>
      %cst_16 = arith.constant 0.000000e+00 : f32
      %17 = vector.broadcast %cst_16 : f32 to vector<2x512xf32>
      %18 = arith.maximumf %16, %17 : vector<2x512xf32>
      %c0_17 = arith.constant 0 : index
      %c0_18 = arith.constant 0 : index
      %19 = vector.load %arg5[%c0_17, %c0_18] : memref<1x512xf32, #tpu.memory_space<vmem>>, vector<1x512xf32>
      %20 = vector.broadcast %19 : vector<1x512xf32> to vector<2x512xf32>
      %21 = arith.mulf %18, %20 : vector<2x512xf32>
      %cst_19 = arith.constant dense<0.000000e+00> : vector<2xf32>
      %22 = vector.multi_reduction <add>, %21, %cst_19 [1] : vector<2x512xf32> to vector<2xf32>
      %23 = vector.shape_cast %22 : vector<2xf32> to vector<2x1xf32>
      %c0_20 = arith.constant 0 : index
      %c0_21 = arith.constant 0 : index
      %24 = vector.load %arg6[%c0_20, %c0_21] : memref<1x1xf32, #tpu.memory_space<vmem>>, vector<1x1xf32>
      %25 = vector.broadcast %24 : vector<1x1xf32> to vector<2x1xf32>
      %26 = arith.addf %23, %25 : vector<2x1xf32>
      %c0_22 = arith.constant 0 : index
      %c0_23 = arith.constant 0 : index
      %27 = vector.load %arg7[%c0_22, %c0_23] : memref<2x1xf32, #tpu.memory_space<vmem>>, vector<2x1xf32>
      tpu.vector_store %arg7[%c0_22, %c0_23], %26 {strides = array<i32>} : memref<2x1xf32, #tpu.memory_space<vmem>>, vector<2x1xf32>,
    } else {
    }
    return
  }
  func.func @transform_0(%arg0: i32, %arg1: i32) -> (i32, i32, i32) {
    %c0_i32 = arith.constant 0 : i32
    %c0_i32_0 = arith.constant 0 : i32
    return %arg0, %c0_i32, %arg1 : i32, i32, i32
  }
  func.func @transform_1(%arg0: i32, %arg1: i32) -> (i32, i32) {
    %c0_i32 = arith.constant 0 : i32
    %c0_i32_0 = arith.constant 0 : i32
    %c0_i32_1 = arith.constant 0 : i32
    return %c0_i32, %c0_i32_0 : i32, i32
  }
  func.func @transform_2(%arg0: i32, %arg1: i32) -> (i32, i32) {
    %c0_i32 = arith.constant 0 : i32
    %c0_i32_0 = arith.constant 0 : i32
    %c0_i32_1 = arith.constant 0 : i32
    return %c0_i32, %c0_i32_0 : i32, i32
  }
  func.func @transform_3(%arg0: i32, %arg1: i32) -> (i32, i32) {
    %c0_i32 = arith.constant 0 : i32
    %c0_i32_0 = arith.constant 0 : i32
    %c0_i32_1 = arith.constant 0 : i32
    return %c0_i32, %c0_i32_0 : i32, i32
  }
  func.func @transform_4(%arg0: i32, %arg1: i32) -> (i32, i32) {
    %c0_i32 = arith.constant 0 : i32
    %c0_i32_0 = arith.constant 0 : i32
    %c0_i32_1 = arith.constant 0 : i32
    return %c0_i32, %c0_i32_0 : i32, i32
  }
  func.func @transform_5(%arg0: i32, %arg1: i32) -> (i32, i32) {
    %c0_i32 = arith.constant 0 : i32
    %c0_i32_0 = arith.constant 0 : i32
    return %arg0, %c0_i32 : i32, i32
  }
}

</mosaic_0001>

<llo_original>
// kernel: tpu_custom_call.1
$region0: #{tpu_custom_call.1}
  #allocation0 [shape = 'u32[]', space=smem, size = 0x4, offset = 0x4, fixed_abs, tag = 'smem constant byte address 0x4 - core index']
  #allocation1 [shape = 'u32[144,128]{1,0:T(1,128)}', space=vmem, size = 0x12000, scoped, tag = 'internal scratch']
  #allocation2 [shape = 'f32[2,4]{1,0:T(2,128)}', space=vmem, size = 0x400, scoped, tag = 'scratch operand']
  #allocation3 [shape = 'f32[1,1]{1,0:T(1,128)S(1)}', space=vmem, size = 0x200, scoped, tag = 'scoped memory for tpu_custom_call.1']
  %s0 = inlined_call_operand.hbm [shape: f32[2,4,256], index: 0, kind: input, shape index: {}]
  %s1 = inlined_call_operand.hbm [shape: f32[4,512], index: 1, kind: input, shape index: {}]
  %s2 = inlined_call_operand.vmem [shape: f32[1,512], index: 2, kind: input, shape index: {}]
  %s3 = inlined_call_operand.vmem [shape: f32[1,512], index: 3, kind: input, shape index: {}]
  %s4 = inlined_call_operand.<no memory space> [shape: f32[1,1], index: 4, kind: input, shape index: {}]
  %s5 = inlined_call_operand.vmem [shape: f32[2,1], index: 5, kind: output, shape index: {}]
  %s6 = sld [smem:[#allocation0]]
  $region46: #{tpu_custom_call.1} parent=0
    _
  %s8 = ssub.s32 1, %s6
  %s9 = scalar_select 0, %s8, %s6
  %v10 = vstv %s4
  %11 = vst [vmem:[#allocation3] sm:$0x1] %v10
  $region1: #{tpu_custom_call.1} parent=0
    #allocation4 [shape = 'u8[8192]{0}', space=vmem, size = 0x2000, scoped, tag = 'input window, operand 0, single buffered']
    #allocation5 [shape = 's32[1]{0}', space=sflag, size = 0x4, scoped, tag = 'scoped memory for tpu_custom_call.1']
    #allocation6 [shape = 'u8[8192]{0}', space=vmem, size = 0x2000, scoped, tag = 'input window, operand 1, single buffered']
    #allocation7 [shape = 's32[1]{0}', space=sflag, size = 0x4, scoped, tag = 'scoped memory for tpu_custom_call.1']
    %12 = vsyncpa [#allocation5], 0
    %13 = vsyncpa [#allocation7], 0
    // Predicated region
    $region2: #{tpu_custom_call.1} parent=1 // pred_check
      _
    $region3: #{tpu_custom_call.1} parent=1 // pred_check_branch
      %15 = sbr.rel (0) target = $region5
    $region4: #{tpu_custom_call.1} parent=1 // pred_region
      %s17 = ssub.s32 256, 256
      %18 = vsyncadd [#allocation5], %s17
      %s19 = sshll.u32 [#allocation4], 4
      %s20 = int_to_ptr.vmem [resolvable:$true] %s19
      %25 = dma.hbm_to_vmem [thread:$0]  %s0, 256, %s20, [#allocation5], 128, 128, 8
    $region5: #{tpu_custom_call.1} parent=1 // pred_fallthru
      _
    // Predicated region
    $region6: #{tpu_custom_call.1} parent=1 // pred_check
      _
    $region7: #{tpu_custom_call.1} parent=1 // pred_check_branch
      %27 = sbr.rel (0) target = $region9
    $region8: #{tpu_custom_call.1} parent=1 // pred_region
      %s29 = ssub.s32 256, 256
      %30 = vsyncadd [#allocation7], %s29
      %s32 = sshll.u32 [#allocation6], 4
      %s33 = int_to_ptr.vmem [resolvable:$true] %s32
      %35 = dma.hbm_to_vmem [thread:$0]  %s1, 256, %s33, [#allocation7]
    $region9: #{tpu_custom_call.1} parent=1 // pred_fallthru
      _
    // Predicated region
    $region10: #{tpu_custom_call.1} parent=1 // pred_check
      _
    $region11: #{tpu_custom_call.1} parent=1 // pred_check_branch
      %37 = sbr.rel (0) target = $region13
    $region12: #{tpu_custom_call.1} parent=1 // pred_region
      _
    $region13: #{tpu_custom_call.1} parent=1 // pred_fallthru
      _
    // Predicated region
    $region14: #{tpu_custom_call.1} parent=1 // pred_check
      _
    $region15: #{tpu_custom_call.1} parent=1 // pred_check_branch
      %39 = sbr.rel (0) target = $region17
    $region16: #{tpu_custom_call.1} parent=1 // pred_region
      _
    $region17: #{tpu_custom_call.1} parent=1 // pred_fallthru
      _
    // Predicated region
    $region18: #{tpu_custom_call.1} parent=1 // pred_check
      _
    $region19: #{tpu_custom_call.1} parent=1 // pred_check_branch
      %41 = sbr.rel (0) target = $region21
    $region20: #{tpu_custom_call.1} parent=1 // pred_region
      _
    $region21: #{tpu_custom_call.1} parent=1 // pred_fallthru
      _
    // Predicated region
    $region22: #{tpu_custom_call.1} parent=1 // pred_check
      _
    $region23: #{tpu_custom_call.1} parent=1 // pred_check_branch
      %43 = sbr.rel (0) target = $region25
    $region24: #{tpu_custom_call.1} parent=1 // pred_region
      %44 = dma.done [#allocation5], 256
    $region25: #{tpu_custom_call.1} parent=1 // pred_fallthru
      _
    // Predicated region
    $region26: #{tpu_custom_call.1} parent=1 // pred_check
      _
    $region27: #{tpu_custom_call.1} parent=1 // pred_check_branch
      %46 = sbr.rel (0) target = $region29
    $region28: #{tpu_custom_call.1} parent=1 // pred_region
      %47 = dma.done [#allocation7], 256
    $region29: #{tpu_custom_call.1} parent=1 // pred_fallthru
      _
    %p48 = scmp.eq.s32.totalorder 0, 0
    // Predicated region
    $region30: #{tpu_custom_call.1} parent=1 // pred_check
      %p49 = pneg %p48
    $region31: #{tpu_custom_call.1} parent=1 // pred_check_branch
      %51 = sbr.rel (%p49) target = $region33
    $region32: #{tpu_custom_call.1} parent=1 // pred_region
      %vm52 = vcmask 25600
      %53 = vst.msk [vmem:[#allocation2] sm:$0x3] %vm52, 0.0
    $region33: #{tpu_custom_call.1} parent=1 // pred_fallthru
      _
    %v54 = vld [vmem:[#allocation4] sm:$0xff]
    %v55 = vld [vmem:[#allocation4 + $0x8] sm:$0xff]
    %v56 = vld [vmem:[#allocation2] sm:$0x3]
    %v59 = vcombine.high %v54, %v54
    %v60 = vcombine.high %v55, %v55
    %vm63 = vcmask 1043456
    %v64 = vsel %vm63, %v54, 0.0
    %v65 = vsel %vm63, %v59, 0.0
    %v66 = vadd.f32 %v64, %v65
    %67 = vadd.xlane.f32.xlu0 %v66
    %v68 = vpop.xlane.xlu0 %67
    %v69 = vsel %vm63, %v55, 0.0
    %v70 = vsel %vm63, %v60, 0.0
    %v71 = vadd.f32 %v69, %v70
    %72 = vadd.xlane.f32.xlu0 %v71
    %v73 = vpop.xlane.xlu0 %72
    %v76 = vlaneseq
    %v77 = vand.u32 %v76, 127
    %v78 = vlaneseq
    %v79 = vshrl.u32 %v78, 7
    %v80 = vsub.s32 %v77, %v79
    %v81 = vrot.slane %v68, %v80
    %v82 = vlaneseq
    %v83 = vshrl.u32 %v82, 7
    %v84 = vsub.s32 %v77, %v83
    %v85 = vrot.slane %v73, %v84
    %vm86 = vcmask 1041409
    %v87 = vsel %vm86, %v85, %v81
    %v89 = vadd.f32 %v56, %v87
    %vm90 = vcmask 25600
    %91 = vst.msk [vmem:[#allocation2] sm:$0x3] %vm90, %v89
    // Predicated region
    $region34: #{tpu_custom_call.1} parent=1 // pred_check
      %p92 = pneg %p48
    $region35: #{tpu_custom_call.1} parent=1 // pred_check_branch
      %94 = sbr.rel (%p92) target = $region37
    $region36: #{tpu_custom_call.1} parent=1 // pred_region
      %v95 = vld [vmem:[#allocation2] sm:$0x3]
      %v96 = vld [vmem:[#allocation6] sm:$0xff]
      %v97 = vld [vmem:[#allocation6 + $0x8] sm:$0xff]
      %v98 = vld [vmem:[%s2] sm:$0xf]
      %v100 = vlaneseq
      %v101 = vshrl.u32 %v100, 7
      %v102 = vsub.s32 0, %v101
      %v103 = vrot.slane %v98, %v102
      %v104 = vlaneseq
      %v105 = vshrl.u32 %v104, 7
      %v106 = vsub.s32 1, %v105
      %v107 = vrot.slane %v98, %v106
      %v108 = vlaneseq
      %v109 = vshrl.u32 %v108, 7
      %v110 = vsub.s32 2, %v109
      %v111 = vrot.slane %v98, %v110
      %v112 = vlaneseq
      %v113 = vshrl.u32 %v112, 7
      %v114 = vsub.s32 3, %v113
      %v115 = vrot.slane %v98, %v114
      %v122 = vcombine.high %v96, %v96
      %v123 = vcombine.high %v97, %v97
      %vm124 = vcmask 31744
      %v126 = vsel %vm124, %v95, 0
      %v128 = vsel %vm63, %v96, 0
      %v130 = vsel %vm63, %v122, 0
      %v132 = vsel %vm63, %v97, 0
      %v134 = vsel %vm63, %v123, 0
      %136 = vmatprep.subr.mxu0 %v130
      %137 = vmatpush1.msra.mxu0 %v128
      %138 = vmatprep.subr.mxu0 0.0
      %139 = vmatpush1.msra.mxu0 0.0
      %140 = vmatprep.subr.mxu0 0.0
      %141 = vmatpush1.msra.mxu0 0.0
      %142 = vmatprep.subr.mxu0 0.0
      %143 = vmatpush1.msra.mxu0 0.0
      %144 = vmatprep.subr.mxu0 0.0
      %145 = vmatpush1.msra.mxu0 0.0
      %146 = vmatprep.subr.mxu0 0.0
      %147 = vmatpush1.msra.mxu0 0.0
      %148 = vmatprep.subr.mxu0 0.0
      %149 = vmatpush1.msra.mxu0 0.0
      %150 = vmatprep.subr.mxu0 0.0
      %151 = vmatpush1.msra.mxu0 0.0
      %152 = vmatprep.subr.mxu0 0.0
      %153 = vmatpush1.msra.mxu0 0.0
      %154 = vmatprep.subr.mxu0 0.0
      %155 = vmatpush1.msra.mxu0 0.0
      %156 = vmatprep.subr.mxu0 0.0
      %157 = vmatpush1.msra.mxu0 0.0
      %158 = vmatprep.subr.mxu0 0.0
      %159 = vmatpush1.msra.mxu0 0.0
      %160 = vmatprep.subr.mxu0 0.0
      %161 = vmatpush1.msra.mxu0 0.0
      %162 = vmatprep.subr.mxu0 0.0
      %163 = vmatpush1.msra.mxu0 0.0
      %164 = vmatprep.subr.mxu0 0.0
      %165 = vmatpush1.msra.mxu0 0.0
      %166 = vmatprep.subr.mxu0 0.0
      %167 = vmatpush1.msra.mxu0 0.0
      %168 = vmatprep.subr.mxu0 0.0
      %169 = vmatpush1.msra.mxu0 0.0
      %170 = vmatprep.subr.mxu0 0.0
      %171 = vmatpush1.msra.mxu0 0.0
      %172 = vmatprep.subr.mxu0 0.0
      %173 = vmatpush1.msra.mxu0 0.0
      %174 = vmatprep.subr.mxu0 0.0
      %175 = vmatpush1.msra.mxu0 0.0
      %176 = vmatprep.subr.mxu0 0.0
      %177 = vmatpush1.msra.mxu0 0.0
      %178 = vmatprep.subr.mxu0 0.0
      %179 = vmatpush1.msra.mxu0 0.0
      %180 = vmatprep.subr.mxu0 0.0
      %181 = vmatpush1.msra.mxu0 0.0
      %182 = vmatprep.subr.mxu0 0.0
      %183 = vmatpush1.msra.mxu0 0.0
      %184 = vmatprep.subr.mxu0 0.0
      %185 = vmatpush1.msra.mxu0 0.0
      %186 = vmatprep.subr.mxu0 0.0
      %187 = vmatpush1.msra.mxu0 0.0
      %188 = vmatprep.subr.mxu0 0.0
      %189 = vmatpush1.msra.mxu0 0.0
      %190 = vmatprep.subr.mxu0 0.0
      %191 = vmatpush1.msra.mxu0 0.0
      %192 = vmatprep.subr.mxu0 0.0
      %193 = vmatpush1.msra.mxu0 0.0
      %194 = vmatprep.subr.mxu0 0.0
      %195 = vmatpush1.msra.mxu0 0.0
      %196 = vmatprep.subr.mxu0 0.0
      %197 = vmatpush1.msra.mxu0 0.0
      %198 = vmatprep.subr.mxu0 0.0
      %199 = vmatpush1.msra.mxu0 0.0
      %200 = vmatprep.mubr.f32.mxu0 0.0
      %201 = vmatmul.mubr.f32.gmra.mrb[0].mxu0 %v126
      %v202 = vpop.f32.mrb[0].mxu0
      %v203 = vadd.f32 %v103, %v202
      %v204 = vpop.f32.mrb[0].mxu0
      %v205 = vadd.f32 %v107, %v204
      %206 = vdwg.mxu0
      %207 = vmatprep.subr.mxu0 %v134
      %208 = vmatpush1.msra.mxu0 %v132
      %209 = vmatprep.subr.mxu0 0.0
      %210 = vmatpush1.msra.mxu0 0.0
      %211 = vmatprep.subr.mxu0 0.0
      %212 = vmatpush1.msra.mxu0 0.0
      %213 = vmatprep.subr.mxu0 0.0
      %214 = vmatpush1.msra.mxu0 0.0
      %215 = vmatprep.subr.mxu0 0.0
      %216 = vmatpush1.msra.mxu0 0.0
      %217 = vmatprep.subr.mxu0 0.0
      %218 = vmatpush1.msra.mxu0 0.0
      %219 = vmatprep.subr.mxu0 0.0
      %220 = vmatpush1.msra.mxu0 0.0
      %221 = vmatprep.subr.mxu0 0.0
      %222 = vmatpush1.msra.mxu0 0.0
      %223 = vmatprep.subr.mxu0 0.0
      %224 = vmatpush1.msra.mxu0 0.0
      %225 = vmatprep.subr.mxu0 0.0
      %226 = vmatpush1.msra.mxu0 0.0
      %227 = vmatprep.subr.mxu0 0.0
      %228 = vmatpush1.msra.mxu0 0.0
      %229 = vmatprep.subr.mxu0 0.0
      %230 = vmatpush1.msra.mxu0 0.0
      %231 = vmatprep.subr.mxu0 0.0
      %232 = vmatpush1.msra.mxu0 0.0
      %233 = vmatprep.subr.mxu0 0.0
      %234 = vmatpush1.msra.mxu0 0.0
      %235 = vmatprep.subr.mxu0 0.0
      %236 = vmatpush1.msra.mxu0 0.0
      %237 = vmatprep.subr.mxu0 0.0
      %238 = vmatpush1.msra.mxu0 0.0
      %239 = vmatprep.subr.mxu0 0.0
      %240 = vmatpush1.msra.mxu0 0.0
      %241 = vmatprep.subr.mxu0 0.0
      %242 = vmatpush1.msra.mxu0 0.0
      %243 = vmatprep.subr.mxu0 0.0
      %244 = vmatpush1.msra.mxu0 0.0
      %245 = vmatprep.subr.mxu0 0.0
      %246 = vmatpush1.msra.mxu0 0.0
      %247 = vmatprep.subr.mxu0 0.0
      %248 = vmatpush1.msra.mxu0 0.0
      %249 = vmatprep.subr.mxu0 0.0
      %250 = vmatpush1.msra.mxu0 0.0
      %251 = vmatprep.subr.mxu0 0.0
      %252 = vmatpush1.msra.mxu0 0.0
      %253 = vmatprep.subr.mxu0 0.0
      %254 = vmatpush1.msra.mxu0 0.0
      %255 = vmatprep.subr.mxu0 0.0
      %256 = vmatpush1.msra.mxu0 0.0
      %257 = vmatprep.subr.mxu0 0.0
      %258 = vmatpush1.msra.mxu0 0.0
      %259 = vmatprep.subr.mxu0 0.0
      %260 = vmatpush1.msra.mxu0 0.0
      %261 = vmatprep.subr.mxu0 0.0
      %262 = vmatpush1.msra.mxu0 0.0
      %263 = vmatprep.subr.mxu0 0.0
      %264 = vmatpush1.msra.mxu0 0.0
      %265 = vmatprep.subr.mxu0 0.0
      %266 = vmatpush1.msra.mxu0 0.0
      %267 = vmatprep.subr.mxu0 0.0
      %268 = vmatpush1.msra.mxu0 0.0
      %269 = vmatprep.subr.mxu0 0.0
      %270 = vmatpush1.msra.mxu0 0.0
      %271 = vmatprep.mubr.f32.mxu0 0.0
      %272 = vmatmul.mubr.f32.gmra.mrb[0].mxu0 %v126
      %v273 = vpop.f32.mrb[0].mxu0
      %v274 = vadd.f32 %v111, %v273
      %v275 = vpop.f32.mrb[0].mxu0
      %v276 = vadd.f32 %v115, %v275
      %277 = vdwg.mxu0
      %v278 = vmax.f32 %v203, 0.0
      %v279 = vmax.f32 %v205, 0.0
      %v280 = vmax.f32 %v274, 0.0
      %v281 = vmax.f32 %v276, 0.0
      %v282 = vld [vmem:[%s3] sm:$0xf]
      %v284 = vlaneseq
      %v285 = vshrl.u32 %v284, 7
      %v286 = vsub.s32 0, %v285
      %v287 = vrot.slane %v282, %v286
      %v288 = vlaneseq
      %v289 = vshrl.u32 %v288, 7
      %v290 = vsub.s32 1, %v289
      %v291 = vrot.slane %v282, %v290
      %v292 = vlaneseq
      %v293 = vshrl.u32 %v292, 7
      %v294 = vsub.s32 2, %v293
      %v295 = vrot.slane %v282, %v294
      %v296 = vlaneseq
      %v297 = vshrl.u32 %v296, 7
      %v298 = vsub.s32 3, %v297
      %v299 = vrot.slane %v282, %v298
      %v304 = vmul.f32 %v278, %v287
      %v305 = vmul.f32 %v279, %v291
      %v306 = vmul.f32 %v280, %v295
      %v307 = vmul.f32 %v281, %v299
      %vm308 = vcmask 1041408
      %v309 = vsel %vm308, %v304, 0.0
      %v310 = vsel %vm308, %v305, 0.0
      %v311 = vadd.f32 %v309, %v310
      %v312 = vsel %vm308, %v306, 0.0
      %v313 = vadd.f32 %v311, %v312
      %v314 = vsel %vm308, %v307, 0.0
      %v315 = vadd.f32 %v313, %v314
      %316 = vadd.xlane.f32.xlu0 %v315
      %v317 = vpop.xlane.xlu0 %316
      %v318 = vld [vmem:[#allocation3] sm:$0x1]
      %v320 = vlaneseq
      %v321 = vshrl.u32 %v320, 7
      %v322 = vsub.s32 0, %v321
      %v323 = vrot.slane %v318, %v322
      %v325 = vadd.f32 %v317, %v323
      %vm326 = vcmask 1024
      %327 = vst.msk [vmem:[%s5] sm:$0x3] %vm326, %v325
    $region37: #{tpu_custom_call.1} parent=1 // pred_fallthru
      _
    // Predicated region
    $region38: #{tpu_custom_call.1} parent=1 // pred_check
      _
    $region39: #{tpu_custom_call.1} parent=1 // pred_check_branch
      %329 = sbr.rel (0) target = $region41
    $region40: #{tpu_custom_call.1} parent=1 // pred_region
      _
    $region41: #{tpu_custom_call.1} parent=1 // pred_fallthru
      _
    // Predicated region
    $region42: #{tpu_custom_call.1} parent=1 // pred_check
      _
    $region43: #{tpu_custom_call.1} parent=1 // pred_check_branch
      %331 = sbr.rel (0) target = $region45
    $region44: #{tpu_custom_call.1} parent=1 // pred_region
      _
    $region45: #{tpu_custom_call.1} parent=1 // pred_fallthru
      _
    %332 = vsyncpa [#allocation5], 1
    %333 = vsyncpa [#allocation7], 1

</llo_original>
